<compile_context>
chip_gen: v7x
topology: tpu7x:2x2x1
jax: 0.10.0
libtpu: 0.0.40
codegen_flags: <defaults>
</compile_context>

<pallas_src>
import jax
import jax.numpy as jnp
from jax.experimental import pallas as pl
from jax.experimental.pallas import tpu as pltpu

# MLP dims from the PyTorch module: 248 -> 124 -> 62 -> 21 -> 6 -> 1
DIMS = (248, 124, 62, 21, 6, 1)


def _round_up(n, m):
    return ((n + m - 1) // m) * m


def mlp_kernel(b_ref, x_ref, w_ref, o_ref):
    # b_ref: (1, d_out) collapsed bias in SMEM (scalar read)
    # x_ref: (TB, d_in) batch tile in VMEM (double-buffered by Pallas)
    # w_ref: (d_in, d_out) collapsed weight, VMEM-resident across grid steps
    acc = jnp.dot(x_ref[...], w_ref[...], preferred_element_type=jnp.float32)
    o_ref[...] = (acc + b_ref[0, 0]).astype(o_ref.dtype)


def collapse_params(params):
    """Fold the 5 bias-affine layers into a single (W_total, b_total)."""
    w_tot, b_tot = params[0]
    for w, b in params[1:]:
        w_tot = w_tot @ w
        b_tot = b_tot @ w + b
    return w_tot, b_tot  # [d_in, d_out], [1, d_out]


def nn_forward(x, params, *, block_b=8192, compute_dtype=jnp.float32):
    """params: list of (W [in,out], b [1,out]) tuples, one per layer.

    compute_dtype=jnp.bfloat16 halves HBM traffic (x and W_total both cast;
    accumulation and bias stay f32) -- recommended on v5e.  Note the looser
    rounding vs the layer-by-layer torch forward in that mode.
    """
    B, d_in = x.shape
    w_tot, b_tot = collapse_params(params)
    d_out = w_tot.shape[1]
    itemsize = jnp.dtype(compute_dtype).itemsize

    # Cast both operands of the dot so Mosaic takes the native (bf16) MXU
    # path without an implicit upcast.
    x = x.astype(compute_dtype)
    w_tot = w_tot.astype(compute_dtype)
    b_tot = b_tot.astype(jnp.float32).reshape(1, d_out)

    # ---- batch tile selection -------------------------------------------
    # Multiple of 8 (sublane), as large as block_b allows: the kernel is a
    # pure HBM stream of x, so a big tile amortizes the ~0.35us/step grid
    # overhead.  Default 8192 rows f32 -> ~8 MB tile, ~16 MB double-buffered.
    tb = min(block_b, _round_up(B, 8))
    if B <= tb and B >= 16:
        # Whole batch would be a single grid step; halve the tile so the
        # "parallel" axis has >=2 steps and can shard across v7x's 2 TCs.
        tb = _round_up(pl.cdiv(B, 2), 8)
    grid = (pl.cdiv(B, tb),)

    # ---- VMEM budget ------------------------------------------------------
    # Double-buffered x tile + double-buffered output tile + resident weight.
    vmem_need = (2 * tb * d_in * itemsize          # x tiles (double buffer)
                 + 2 * tb * d_out * 4              # out tiles (f32)
                 + d_in * d_out * itemsize)        # resident collapsed weight
    # Generous headroom, but never above v7x's 64 MiB physical VMEM.
    vmem_limit = int(min(max(vmem_need * 2, 32 << 20), 60 << 20))

    cost = pl.CostEstimate(
        flops=2 * B * d_in * d_out,
        transcendentals=0,
        bytes_accessed=(B * d_in * itemsize + B * d_out * 4
                        + d_in * d_out * itemsize + d_out * 4),
    )

    return pl.pallas_call(
        mlp_kernel,
        out_shape=jax.ShapeDtypeStruct((B, d_out), jnp.float32),
        grid=grid,
        in_specs=[
            # collapsed scalar bias in SMEM, constant across grid steps
            pl.BlockSpec((1, d_out), lambda i: (0, 0),
                         memory_space=pltpu.MemorySpace.SMEM),
            # streamed batch tile of x (auto double-buffered)
            pl.BlockSpec((tb, d_in), lambda i: (i, 0)),
            # collapsed weight, VMEM-resident (constant index map)
            pl.BlockSpec((d_in, d_out), lambda i: (0, 0)),
        ],
        out_specs=pl.BlockSpec((tb, d_out), lambda i: (i, 0)),
        compiler_params=pltpu.CompilerParams(
            # independent batch tiles -> shard across v7x's 2 TensorCores
            dimension_semantics=("parallel",),
            vmem_limit_bytes=vmem_limit,
        ),
        cost_estimate=cost,
    )(b_tot, x, w_tot)


def init_params(key):
    """Deterministic init mimicking nn.Linear's uniform(-1/sqrt(fan_in), ...)."""
    params = []
    for i in range(len(DIMS) - 1):
        d_in, d_out = DIMS[i], DIMS[i + 1]
        key, kw, kb = jax.random.split(key, 3)
        bound = 1.0 / jnp.sqrt(jnp.float32(d_in))
        # Stored as [in, out] (transpose of PyTorch's [out, in]).
        w = jax.random.uniform(kw, (d_in, d_out), jnp.float32, -bound, bound)
        b = jax.random.uniform(kb, (1, d_out), jnp.float32, -bound, bound)
        params.append((w, b))
    return params


def nn_forward_ref(x, params):
    # Layer-by-layer reference matching the original torch forward exactly.
    h = x
    for w, b in params:
        h = h @ w + b
    return h


# TODO(synk): the module's train()/optimizer/MSELoss are host-side training
# loop code, not part of the forward pass, and are not translated.

if __name__ == "__main__":
    key = jax.random.PRNGKey(0)
    key, kx = jax.random.split(key)
    B = 8
    x = jax.random.normal(kx, (B, DIMS[0]), jnp.float32)

    params = init_params(key)

    out = nn_forward(x, params)
    out = jax.block_until_ready(out)

    ref = nn_forward_ref(x, params)
    assert out.shape == (B, DIMS[-1])
    # Collapsing the layers changes rounding order slightly; still far inside
    # this tolerance in f32 (the default compute_dtype used here).
    assert jnp.allclose(out, ref, atol=1e-4, rtol=1e-3), "mismatch vs JAX reference"

    print("KERNEL_OK")
</pallas_src>

<mosaic_0001>
module attributes {stable_mosaic.version = 11 : i64} {
  func.func @mlp_kernel(%arg0: i32, %arg1: memref<1x1xf32, #tpu.memory_space<smem>>, %arg2: memref<8x248xf32, #tpu.memory_space<vmem>>, %arg3: memref<248x1xf32, #tpu.memory_space<vmem>>, %arg4: memref<8x1xf32, #tpu.memory_space<vmem>>) attributes {dimension_semantics = [#tpu.dimension_semantics<parallel>], iteration_bounds = array<i64: 1>, scalar_prefetch = 0 : i64, scratch_operands = 0 : i64, tpu.core_type = #tpu.core_type<tc>, window_params = [{transform_indices = @transform_0, window_bounds = array<i64: 1, 1>}, {transform_indices = @transform_1, window_bounds = array<i64: 8, 248>}, {pipeline_mode = #tpu.pipeline_mode<synchronous>, transform_indices = @transform_2, window_bounds = array<i64: 248, 1>}, {transform_indices = @transform_3, window_bounds = array<i64: 8, 1>}]} {
    %c0 = arith.constant 0 : index
    %c0_0 = arith.constant 0 : index
    %0 = vector.load %arg2[%c0, %c0_0] : memref<8x248xf32, #tpu.memory_space<vmem>>, vector<8x248xf32>
    %c0_1 = arith.constant 0 : index
    %c0_2 = arith.constant 0 : index
    %1 = vector.load %arg3[%c0_1, %c0_2] : memref<248x1xf32, #tpu.memory_space<vmem>>, vector<248x1xf32>
    %cst = arith.constant dense<0.000000e+00> : vector<8x1xf32>
    %2 = tpu.matmul %0, %1, %cst {dimension_numbers = #tpu.dot_dimension_numbers<[1], [0], [0], [1], [0, 0, 1, 1], [], []>} : vector<8x248xf32>, vector<248x1xf32>, vector<8x1xf32> -> vector<8x1xf32>
    %c0_3 = arith.constant 0 : index
    %c0_4 = arith.constant 0 : index
    %3 = memref.load %arg1[%c0_3, %c0_4] : memref<1x1xf32, #tpu.memory_space<smem>>
    %4 = vector.broadcast %3 : f32 to vector<8x1xf32>
    %5 = arith.addf %2, %4 : vector<8x1xf32>
    %c0_5 = arith.constant 0 : index
    %c0_6 = arith.constant 0 : index
    %6 = vector.load %arg4[%c0_5, %c0_6] : memref<8x1xf32, #tpu.memory_space<vmem>>, vector<8x1xf32>
    tpu.vector_store %arg4[%c0_5, %c0_6], %5 {strides = array<i32>} : memref<8x1xf32, #tpu.memory_space<vmem>>, vector<8x1xf32>,
    return
  }
  func.func @transform_0(%arg0: i32) -> (i32, i32) {
    %c0_i32 = arith.constant 0 : i32
    %c0_i32_0 = arith.constant 0 : i32
    %c0_i32_1 = arith.constant 0 : i32
    return %c0_i32, %c0_i32_0 : i32, i32
  }
  func.func @transform_1(%arg0: i32) -> (i32, i32) {
    %c0_i32 = arith.constant 0 : i32
    %c0_i32_0 = arith.constant 0 : i32
    return %arg0, %c0_i32 : i32, i32
  }
  func.func @transform_2(%arg0: i32) -> (i32, i32) {
    %c0_i32 = arith.constant 0 : i32
    %c0_i32_0 = arith.constant 0 : i32
    %c0_i32_1 = arith.constant 0 : i32
    return %c0_i32, %c0_i32_0 : i32, i32
  }
  func.func @transform_3(%arg0: i32) -> (i32, i32) {
    %c0_i32 = arith.constant 0 : i32
    %c0_i32_0 = arith.constant 0 : i32
    return %arg0, %c0_i32 : i32, i32
  }
}

</mosaic_0001>

<llo_original>
// kernel: tpu_custom_call.1
$region0: #{tpu_custom_call.1}
  #allocation0 [shape = 'u32[]', space=smem, size = 0x4, offset = 0x4, fixed_abs, tag = 'smem constant byte address 0x4 - core index']
  #allocation1 [shape = 'u32[144,128]{1,0:T(1,128)}', space=vmem, size = 0x12000, scoped, tag = 'internal scratch']
  #allocation2 [shape = 'f32[1,1]{1,0:T(1,128)S(6)}', space=smem, size = 0x200, scoped, tag = 'scoped memory for tpu_custom_call.1']
  %s0 = inlined_call_operand.<no memory space> [shape: f32[1,1], index: 0, kind: input, shape index: {}]
  %s1 = inlined_call_operand.vmem [shape: f32[8,248], index: 1, kind: input, shape index: {}]
  %s2 = inlined_call_operand.vmem [shape: f32[248,1], index: 2, kind: input, shape index: {}]
  %s3 = inlined_call_operand.vmem [shape: f32[8,1], index: 3, kind: output, shape index: {}]
  %s4 = sld [smem:[#allocation0]]
  $region22: #{tpu_custom_call.1} parent=0
    _
  %s6 = ssub.s32 1, %s4
  %s7 = scalar_select 0, %s6, %s4
  %8 = sst [smem:[#allocation2]] %s0
  // Predicated region
  $region2: #{tpu_custom_call.1} parent=0 // pred_check
    _
  $region3: #{tpu_custom_call.1} parent=0 // pred_check_branch
    %10 = sbr.rel (0) target = $region5
  $region4: #{tpu_custom_call.1} parent=0 // pred_region
    _
  $region5: #{tpu_custom_call.1} parent=0 // pred_fallthru
    _
  // Predicated region
  $region6: #{tpu_custom_call.1} parent=0 // pred_check
    _
  $region7: #{tpu_custom_call.1} parent=0 // pred_check_branch
    %12 = sbr.rel (0) target = $region9
  $region8: #{tpu_custom_call.1} parent=0 // pred_region
    _
  $region9: #{tpu_custom_call.1} parent=0 // pred_fallthru
    _
  // Predicated region
  $region10: #{tpu_custom_call.1} parent=0 // pred_check
    _
  $region11: #{tpu_custom_call.1} parent=0 // pred_check_branch
    %14 = sbr.rel (0) target = $region13
  $region12: #{tpu_custom_call.1} parent=0 // pred_region
    _
  $region13: #{tpu_custom_call.1} parent=0 // pred_fallthru
    _
  %v15 = vld [vmem:[%s1] sm:$0xff]
  %v16 = vld [vmem:[%s1 + $0x8] sm:$0xff]
  %v17 = vld [vmem:[%s2] sm:$0xff]
  %v18 = vld [vmem:[%s2 + $0x8] sm:$0xff]
  %v19 = vld [vmem:[%s2 + $0x10] sm:$0xff]
  %v20 = vld [vmem:[%s2 + $0x18] sm:$0xff]
  %v21 = vld [vmem:[%s2 + $0x20] sm:$0xff]
  %v22 = vld [vmem:[%s2 + $0x28] sm:$0xff]
  %v23 = vld [vmem:[%s2 + $0x30] sm:$0xff]
  %v24 = vld [vmem:[%s2 + $0x38] sm:$0xff]
  %v25 = vld [vmem:[%s2 + $0x40] sm:$0xff]
  %v26 = vld [vmem:[%s2 + $0x48] sm:$0xff]
  %v27 = vld [vmem:[%s2 + $0x50] sm:$0xff]
  %v28 = vld [vmem:[%s2 + $0x58] sm:$0xff]
  %v29 = vld [vmem:[%s2 + $0x60] sm:$0xff]
  %v30 = vld [vmem:[%s2 + $0x68] sm:$0xff]
  %v31 = vld [vmem:[%s2 + $0x70] sm:$0xff]
  %v32 = vld [vmem:[%s2 + $0x78] sm:$0xff]
  %v33 = vld [vmem:[%s2 + $0x80] sm:$0xff]
  %v34 = vld [vmem:[%s2 + $0x88] sm:$0xff]
  %v35 = vld [vmem:[%s2 + $0x90] sm:$0xff]
  %v36 = vld [vmem:[%s2 + $0x98] sm:$0xff]
  %v37 = vld [vmem:[%s2 + $0xa0] sm:$0xff]
  %v38 = vld [vmem:[%s2 + $0xa8] sm:$0xff]
  %v39 = vld [vmem:[%s2 + $0xb0] sm:$0xff]
  %v40 = vld [vmem:[%s2 + $0xb8] sm:$0xff]
  %v41 = vld [vmem:[%s2 + $0xc0] sm:$0xff]
  %v42 = vld [vmem:[%s2 + $0xc8] sm:$0xff]
  %v43 = vld [vmem:[%s2 + $0xd0] sm:$0xff]
  %v44 = vld [vmem:[%s2 + $0xd8] sm:$0xff]
  %v45 = vld [vmem:[%s2 + $0xe0] sm:$0xff]
  %v46 = vld [vmem:[%s2 + $0xe8] sm:$0xff]
  %v47 = vld [vmem:[%s2 + $0xf0] sm:$0xff]
  %s48 = sld [smem:[#allocation2]]
  %v49 = vstv %s48
  %vm50 = vcmask 982016
  %v52 = vsel %vm50, %v16, 0
  %54 = vmatprep.subr.mxu0 0.0
  %55 = vmatpush1.msra.mxu0 %v17
  %56 = vmatprep.subr.mxu0 0.0
  %57 = vmatpush1.msra.mxu0 %v18
  %58 = vmatprep.subr.mxu0 0.0
  %59 = vmatpush1.msra.mxu0 %v19
  %60 = vmatprep.subr.mxu0 0.0
  %61 = vmatpush1.msra.mxu0 %v20
  %62 = vmatprep.subr.mxu0 0.0
  %63 = vmatpush1.msra.mxu0 %v21
  %64 = vmatprep.subr.mxu0 0.0
  %65 = vmatpush1.msra.mxu0 %v22
  %66 = vmatprep.subr.mxu0 0.0
  %67 = vmatpush1.msra.mxu0 %v23
  %68 = vmatprep.subr.mxu0 0.0
  %69 = vmatpush1.msra.mxu0 %v24
  %70 = vmatprep.subr.mxu0 0.0
  %71 = vmatpush1.msra.mxu0 %v25
  %72 = vmatprep.subr.mxu0 0.0
  %73 = vmatpush1.msra.mxu0 %v26
  %74 = vmatprep.subr.mxu0 0.0
  %75 = vmatpush1.msra.mxu0 %v27
  %76 = vmatprep.subr.mxu0 0.0
  %77 = vmatpush1.msra.mxu0 %v28
  %78 = vmatprep.subr.mxu0 0.0
  %79 = vmatpush1.msra.mxu0 %v29
  %80 = vmatprep.subr.mxu0 0.0
  %81 = vmatpush1.msra.mxu0 %v30
  %82 = vmatprep.subr.mxu0 0.0
  %83 = vmatpush1.msra.mxu0 %v31
  %84 = vmatprep.subr.mxu0 0.0
  %85 = vmatpush1.msra.mxu0 %v32
  %86 = vmatprep.subr.mxu0 0.0
  %87 = vmatpush1.msra.mxu0 %v33
  %88 = vmatprep.subr.mxu0 0.0
  %89 = vmatpush1.msra.mxu0 %v34
  %90 = vmatprep.subr.mxu0 0.0
  %91 = vmatpush1.msra.mxu0 %v35
  %92 = vmatprep.subr.mxu0 0.0
  %93 = vmatpush1.msra.mxu0 %v36
  %94 = vmatprep.subr.mxu0 0.0
  %95 = vmatpush1.msra.mxu0 %v37
  %96 = vmatprep.subr.mxu0 0.0
  %97 = vmatpush1.msra.mxu0 %v38
  %98 = vmatprep.subr.mxu0 0.0
  %99 = vmatpush1.msra.mxu0 %v39
  %100 = vmatprep.subr.mxu0 0.0
  %101 = vmatpush1.msra.mxu0 %v40
  %102 = vmatprep.subr.mxu0 0.0
  %103 = vmatpush1.msra.mxu0 %v41
  %104 = vmatprep.subr.mxu0 0.0
  %105 = vmatpush1.msra.mxu0 %v42
  %106 = vmatprep.subr.mxu0 0.0
  %107 = vmatpush1.msra.mxu0 %v43
  %108 = vmatprep.subr.mxu0 0.0
  %109 = vmatpush1.msra.mxu0 %v44
  %110 = vmatprep.subr.mxu0 0.0
  %111 = vmatpush1.msra.mxu0 %v45
  %112 = vmatprep.subr.mxu0 0.0
  %113 = vmatpush1.msra.mxu0 %v46
  %114 = vmatprep.subr.mxu0 0.0
  %115 = vmatpush1.msra.mxu0 %v47
  %116 = vmatprep.subr.mxu0 0.0
  %117 = vmatpush1.msra.mxu0 0.0
  %118 = vmatprep.mubr.f32.mxu0 %v52
  %119 = vmatmul.mubr.f32.gmra.mrb[0].mxu0 %v15
  %v120 = vpop.f32.mrb[0].mxu0
  %v121 = vadd.f32 %v49, %v120
  %v122 = vpop.f32.mrb[0].mxu0
  %123 = vdwg.mxu0
  %vm124 = vcmask 7168
  %125 = vst.msk [vmem:[%s3] sm:$0xff] %vm124, %v121
  // Predicated region
  $region14: #{tpu_custom_call.1} parent=0 // pred_check
    _
  $region15: #{tpu_custom_call.1} parent=0 // pred_check_branch
    %127 = sbr.rel (0) target = $region17
  $region16: #{tpu_custom_call.1} parent=0 // pred_region
    _
  $region17: #{tpu_custom_call.1} parent=0 // pred_fallthru
    _
  // Predicated region
  $region18: #{tpu_custom_call.1} parent=0 // pred_check
    _
  $region19: #{tpu_custom_call.1} parent=0 // pred_check_branch
    %129 = sbr.rel (0) target = $region21
  $region20: #{tpu_custom_call.1} parent=0 // pred_region
    _
  $region21: #{tpu_custom_call.1} parent=0 // pred_fallthru
    _

</llo_original>
